<compile_context>
chip_gen: v5e
topology: v5e:2x2
jax: 0.10.0
libtpu: 0.0.40
codegen_flags: <defaults>
</compile_context>

<pallas_src>
import functools

import jax
import jax.numpy as jnp
from jax.experimental import pallas as pl
from jax.experimental.pallas import tpu as pltpu


def _dsoftmax_kernel(tgt_ref, cos_ref, loss_ref, *scratch,
                     s, eps, conf_penalty, block_c, num_classes, acc_w,
                     c_ragged):
    use_penalty = conf_penalty > 0.0
    t_acc, nt_acc = scratch[0], scratch[1]
    w_acc = scratch[2] if use_penalty else None

    k = pl.program_id(1)                      # class-tile index ("arbitrary")

    @pl.when(k == 0)
    def _init():
        t_acc[...] = jnp.zeros_like(t_acc)
        nt_acc[...] = jnp.zeros_like(nt_acc)
        if use_penalty:
            w_acc[...] = jnp.zeros_like(w_acc)

    cos = cos_ref[...].astype(jnp.float32)    # (TB, TC); upcast in-kernel only
    tb, tc = cos.shape
    scaled = s * cos
    logits = jnp.exp(scaled)                  # single EUP pass per element

    # one-hot "scatter_(1, target, 1)": iota compare.  The tile origin offset
    # is applied to the (TB,1) target column, not the (TB,TC) iota (saves one
    # VALU add per element).
    col = jax.lax.broadcasted_iota(jnp.int32, (tb, tc), 1)
    tgt_local = tgt_ref[...] - k * block_c    # (TB, 1)

    def _lane_reduce(x):
        # (TB, TC) -> (TB, acc_w) per-lane partial sums.  acc_w == 128 keeps
        # the per-tile work on the VALU (lane-block adds); the single XLU
        # cross-lane reduce is deferred to the finalize block.
        if acc_w == 1:
            return jnp.sum(x, axis=1, keepdims=True)
        out = x[:, 0:acc_w]
        for j in range(1, tc // acc_w):
            out = out + x[:, j * acc_w:(j + 1) * acc_w]
        return out

    def _accumulate(lg, sc):
        onehot = col == tgt_local             # (TB, TC) bool
        masked = jnp.where(onehot, lg, 0.0)   # target logit (or 0) per element
        t_acc[...] += _lane_reduce(masked)
        # Elementwise subtract is exact (x-x==0, x-0==x) -> no catastrophic
        # cancellation; replaces a second full-tile select.
        nt_acc[...] += _lane_reduce(lg - masked)
        if use_penalty:
            # sum_i e_i * (s*cos_i), reusing `lg` -> no second exp / LSE pass.
            w_acc[...] += _lane_reduce(lg * sc)

    if c_ragged:
        # Only the final class tile has out-of-range lanes (garbage DMA fill).
        # Mask only there; every other tile stays select-free.
        is_last = k == pl.num_programs(1) - 1

        @pl.when(is_last)
        def _ragged_tile():
            valid = col < (num_classes - k * block_c)
            lg = jnp.where(valid, logits, 0.0)
            sc = jnp.where(valid, scaled, 0.0) if use_penalty else scaled
            _accumulate(lg, sc)

        @pl.when(jnp.logical_not(is_last))
        def _dense_tile():
            _accumulate(logits, scaled)
    else:
        _accumulate(logits, scaled)

    @pl.when(k == pl.num_programs(1) - 1)
    def _finalize():
        target_z = jnp.sum(t_acc[...], axis=1, keepdims=True)      # (TB, 1)
        non_target_z = jnp.sum(nt_acc[...], axis=1, keepdims=True)
        loss = jnp.log(1.0 + eps / target_z) + jnp.log(1.0 + non_target_z)
        if use_penalty:
            total_z = target_z + non_target_z
            # H(softmax(s*cos)) = log Z - (sum_i e_i * s*cos_i) / Z
            wsum = jnp.sum(w_acc[...], axis=1, keepdims=True)
            ent = jnp.log(total_z) - wsum / total_z
            loss = jnp.maximum(loss - conf_penalty * ent, 0.0)
        loss_ref[...] = loss                  # per-sample loss, (TB, 1)


def _default_tiles(block_b, block_c):
    """Generation-aware tile sizes + scoped-VMEM limit (overridable)."""
    vmem_bytes = 64 * 1024 * 1024
    try:
        vmem_bytes = getattr(pltpu.get_tpu_info(), "vmem_capacity_bytes",
                             vmem_bytes)
    except Exception:  # pragma: no cover - conservative fallback
        pass
    if vmem_bytes >= 96 * 1024 * 1024:
        # v5e / v6e: 128 MiB physical VMEM, single TensorCore -> large class
        # tiles (long contiguous DMA rows, fewer grid steps), 64 MiB limit.
        bb, bc, lim = 256, 8192, 64 * 1024 * 1024
    else:
        # v7x: 64 MiB VMEM, 2 TensorCores -> smaller batch tile so the
        # "parallel" batch axis has >= 2 grid steps for typical batches.
        bb, bc, lim = 128, 4096, 32 * 1024 * 1024
    if block_b is not None:
        bb = block_b
    if block_c is not None:
        bc = block_c
    return bb, bc, lim


def dsoftmax_loss(cos_theta, target, *, s=30.0, d=0.9, conf_penalty=0.0,
                  block_b=None, block_c=None):
    """JAX/Pallas equivalent of DSoftmaxLoss.forward. Returns a scalar.

    cos_theta may be f32 or bf16 (streamed in its native dtype, no padding
    copies; ragged last tiles are masked in-kernel).
    """
    B, C = cos_theta.shape
    eps = float(s) * float(d)
    use_penalty = float(conf_penalty) > 0.0

    blk_b, blk_c, vmem_limit = _default_tiles(block_b, block_c)

    # Full extent when small (any size is legal if equal to the array dim),
    # otherwise (8, 128)-aligned tiles; ragged last tiles handled in-kernel.
    TB = B if B <= blk_b else blk_b
    TC = C if C <= blk_c else blk_c
    nb = pl.cdiv(B, TB)
    nc = pl.cdiv(C, TC)
    c_ragged = (C % TC) != 0

    # Lane-partial accumulators when the class tile is lane-block aligned.
    acc_w = 128 if (TC >= 128 and TC % 128 == 0) else 1

    tgt = target.reshape(B, 1).astype(jnp.int32)

    kernel = functools.partial(
        _dsoftmax_kernel, s=float(s), eps=eps,
        conf_penalty=float(conf_penalty), block_c=TC, num_classes=C,
        acc_w=acc_w, c_ragged=c_ragged)

    n_scratch = 3 if use_penalty else 2
    scratch_shapes = [pltpu.VMEM((TB, acc_w), jnp.float32)] * n_scratch

    itemsize = jnp.dtype(cos_theta.dtype).itemsize
    cost = pl.CostEstimate(
        flops=6 * B * C,
        transcendentals=B * C,
        bytes_accessed=B * C * itemsize + 2 * B * 4)

    # NOTE: if a profile shows exposed DMA waits at these tile sizes, adding
    # pipeline_mode=pl.Buffered(3) to the cos_theta BlockSpec is the next knob.
    per_sample = pl.pallas_call(
        kernel,
        out_shape=jax.ShapeDtypeStruct((B, 1), jnp.float32),
        grid_spec=pltpu.PrefetchScalarGridSpec(
            num_scalar_prefetch=0,
            grid=(nb, nc),
            in_specs=[
                pl.BlockSpec((TB, 1), lambda b, k: (b, 0)),    # target ids
                pl.BlockSpec((TB, TC), lambda b, k: (b, k)),   # cos_theta
            ],
            out_specs=pl.BlockSpec((TB, 1), lambda b, k: (b, 0)),
            scratch_shapes=scratch_shapes,
        ),
        compiler_params=pltpu.CompilerParams(
            dimension_semantics=("parallel", "arbitrary"),
            vmem_limit_bytes=vmem_limit,
        ),
        cost_estimate=cost,
    )(tgt, cos_theta)

    loss = per_sample[:, 0]
    if use_penalty:
        # Matches PyTorch exactly: divide by the nonzero count (which, like the
        # original, yields inf/nan if every sample was clamped to zero).
        nonzero = jnp.sum((loss != 0.0).astype(jnp.float32))
        return jnp.sum(loss) / nonzero
    return jnp.mean(loss)


def _reference(cos_theta, target, *, s=30.0, d=0.9, conf_penalty=0.0):
    """Plain-JAX reference mirroring the PyTorch forward (both branches)."""
    cos = cos_theta.astype(jnp.float32)
    eps = s * d
    onehot = jax.nn.one_hot(target, cos.shape[1], dtype=jnp.bool_)
    logits = jnp.exp(s * cos)
    target_z = jnp.sum(jnp.where(onehot, logits, 0.0), axis=1)
    non_target_z = jnp.sum(jnp.where(onehot, 0.0, logits), axis=1)
    loss = jnp.log(1.0 + eps / target_z) + jnp.log(1.0 + non_target_z)
    if conf_penalty > 0.0:
        log_probs = jax.nn.log_softmax(s * cos, axis=1)
        probs = jnp.exp(log_probs)
        ent = jnp.sum(-probs * jnp.log(jnp.maximum(probs, 1e-12)), axis=1)
        loss = jnp.maximum(loss - conf_penalty * ent, 0.0)
        nonzero = jnp.sum((loss != 0.0).astype(jnp.float32))
        return jnp.sum(loss) / nonzero
    return jnp.mean(loss)


if __name__ == "__main__":
    key = jax.random.PRNGKey(0)
    B, C = 8, 16  # small shapes: batch=8 samples, 16 classes (cos_theta logits)
    k1, k2 = jax.random.split(key)
    cos_theta = jax.random.uniform(k1, (B, C), minval=-1.0, maxval=1.0,
                                   dtype=jnp.float32)
    target = jax.random.randint(k2, (B,), 0, C, dtype=jnp.int32)

    # 1) base path (conf_penalty == 0), f32 input, single tile
    loss = dsoftmax_loss(cos_theta, target)
    jax.block_until_ready(loss)
    ref = _reference(cos_theta, target)
    assert jnp.allclose(loss, ref, rtol=1e-4, atol=1e-4), (loss, ref)

    # 2) confidence-penalty path (entropy + relu + nonzero-mean)
    loss_p = dsoftmax_loss(cos_theta, target, conf_penalty=0.1)
    jax.block_until_ready(loss_p)
    ref_p = _reference(cos_theta, target, conf_penalty=0.1)
    assert jnp.allclose(loss_p, ref_p, rtol=1e-3, atol=1e-3), (loss_p, ref_p)

    # 3) bf16 input DMA'd natively (no wrapper-side upcast)
    cos_bf16 = cos_theta.astype(jnp.bfloat16)
    loss_bf = dsoftmax_loss(cos_bf16, target)
    jax.block_until_ready(loss_bf)
    ref_bf = _reference(cos_bf16, target)
    assert jnp.allclose(loss_bf, ref_bf, rtol=5e-3, atol=5e-3), (loss_bf, ref_bf)

    # 4) tiled class axis with a ragged last tile (no padding copy),
    #    lane-partial accumulators (TC multiple of 128)
    B2, C2 = 16, 640
    k3, k4 = jax.random.split(k2)
    cos2 = jax.random.uniform(k3, (B2, C2), minval=-1.0, maxval=1.0,
                              dtype=jnp.float32)
    tgt2 = jax.random.randint(k4, (B2,), 0, C2, dtype=jnp.int32)
    loss2 = dsoftmax_loss(cos2, tgt2, block_c=256)
    jax.block_until_ready(loss2)
    ref2 = _reference(cos2, tgt2)
    assert jnp.allclose(loss2, ref2, rtol=1e-4, atol=1e-4), (loss2, ref2)

    # 5) ragged batch tile + ragged class tile + conf_penalty all at once
    B3, C3 = 20, 200
    k5, k6 = jax.random.split(k4)
    cos3 = jax.random.uniform(k5, (B3, C3), minval=-1.0, maxval=1.0,
                              dtype=jnp.float32)
    tgt3 = jax.random.randint(k6, (B3,), 0, C3, dtype=jnp.int32)
    loss3 = dsoftmax_loss(cos3, tgt3, conf_penalty=0.1, block_b=16, block_c=128)
    jax.block_until_ready(loss3)
    ref3 = _reference(cos3, tgt3, conf_penalty=0.1)
    assert jnp.allclose(loss3, ref3, rtol=1e-3, atol=1e-3), (loss3, ref3)

    print("KERNEL_OK")
</pallas_src>

<mosaic_0001>
module attributes {stable_mosaic.version = 11 : i64} {
  func.func @_dsoftmax_kernel(%arg0: i32, %arg1: i32, %arg2: memref<8x1xi32, #tpu.memory_space<vmem>>, %arg3: memref<8x16xf32, #tpu.memory_space<vmem>>, %arg4: memref<8x1xf32, #tpu.memory_space<vmem>>, %arg5: memref<8x1xf32, #tpu.memory_space<vmem>>, %arg6: memref<8x1xf32, #tpu.memory_space<vmem>>) attributes {dimension_semantics = [#tpu.dimension_semantics<parallel>, #tpu.dimension_semantics<arbitrary>], iteration_bounds = array<i64: 1, 1>, scalar_prefetch = 0 : i64, scratch_operands = 2 : i64, tpu.core_type = #tpu.core_type<tc>, window_params = [{transform_indices = @transform_0, window_bounds = array<i64: 8, 1>}, {transform_indices = @transform_1, window_bounds = array<i64: 8, 16>}, {transform_indices = @transform_2, window_bounds = array<i64: 8, 1>}]} {
    %c0_i32 = arith.constant 0 : i32
    %0 = arith.cmpi eq, %arg1, %c0_i32 : i32
    %1 = arith.extui %0 : i1 to i32
    %c0_i32_0 = arith.constant 0 : i32
    %2 = arith.cmpi ne, %1, %c0_i32_0 : i32
    scf.if %2 {
      %cst_17 = arith.constant 0.000000e+00 : f32
      %30 = vector.broadcast %cst_17 : f32 to vector<8x1xf32>
      %c0_18 = arith.constant 0 : index
      %c0_19 = arith.constant 0 : index
      %31 = vector.load %arg5[%c0_18, %c0_19] : memref<8x1xf32, #tpu.memory_space<vmem>>, vector<8x1xf32>
      tpu.vector_store %arg5[%c0_18, %c0_19], %30 {strides = array<i32>} : memref<8x1xf32, #tpu.memory_space<vmem>>, vector<8x1xf32>,
      %cst_20 = arith.constant 0.000000e+00 : f32
      %32 = vector.broadcast %cst_20 : f32 to vector<8x1xf32>
      %c0_21 = arith.constant 0 : index
      %c0_22 = arith.constant 0 : index
      %33 = vector.load %arg6[%c0_21, %c0_22] : memref<8x1xf32, #tpu.memory_space<vmem>>, vector<8x1xf32>
      tpu.vector_store %arg6[%c0_21, %c0_22], %32 {strides = array<i32>} : memref<8x1xf32, #tpu.memory_space<vmem>>, vector<8x1xf32>,
    } else {
    }
    %c0 = arith.constant 0 : index
    %c0_1 = arith.constant 0 : index
    %3 = vector.load %arg3[%c0, %c0_1] : memref<8x16xf32, #tpu.memory_space<vmem>>, vector<8x16xf32>
    %cst = arith.constant 3.000000e+01 : f32
    %4 = vector.broadcast %cst : f32 to vector<8x16xf32>
    %5 = arith.mulf %4, %3 : vector<8x16xf32>
    %6 = math.exp %5 : vector<8x16xf32>
    %7 = tpu.iota {dimensions = array<i32: 1>} : vector<8x16xi32>
    %c0_2 = arith.constant 0 : index
    %c0_3 = arith.constant 0 : index
    %8 = vector.load %arg2[%c0_2, %c0_3] : memref<8x1xi32, #tpu.memory_space<vmem>>, vector<8x1xi32>
    %c16_i32 = arith.constant 16 : i32
    %9 = arith.muli %arg1, %c16_i32 : i32
    %10 = vector.broadcast %9 : i32 to vector<8x1xi32>
    %11 = arith.subi %8, %10 : vector<8x1xi32>
    %12 = vector.broadcast %11 : vector<8x1xi32> to vector<8x16xi32>
    %13 = arith.cmpi eq, %7, %12 : vector<8x16xi32>
    %cst_4 = arith.constant 0.000000e+00 : f32
    %14 = vector.broadcast %cst_4 : f32 to vector<8x16xf32>
    %15 = arith.select %13, %6, %14 : vector<8x16xi1>, vector<8x16xf32>
    %c0_5 = arith.constant 0 : index
    %c0_6 = arith.constant 0 : index
    %16 = vector.load %arg5[%c0_5, %c0_6] : memref<8x1xf32, #tpu.memory_space<vmem>>, vector<8x1xf32>
    %cst_7 = arith.constant dense<0.000000e+00> : vector<8xf32>
    %17 = vector.multi_reduction <add>, %15, %cst_7 [1] : vector<8x16xf32> to vector<8xf32>
    %18 = vector.shape_cast %17 : vector<8xf32> to vector<8x1xf32>
    %19 = arith.addf %16, %18 : vector<8x1xf32>
    %c0_8 = arith.constant 0 : index
    %c0_9 = arith.constant 0 : index
    %20 = vector.load %arg5[%c0_8, %c0_9] : memref<8x1xf32, #tpu.memory_space<vmem>>, vector<8x1xf32>
    tpu.vector_store %arg5[%c0_8, %c0_9], %19 {strides = array<i32>} : memref<8x1xf32, #tpu.memory_space<vmem>>, vector<8x1xf32>,
    %c0_10 = arith.constant 0 : index
    %c0_11 = arith.constant 0 : index
    %21 = vector.load %arg6[%c0_10, %c0_11] : memref<8x1xf32, #tpu.memory_space<vmem>>, vector<8x1xf32>
    %22 = arith.subf %6, %15 : vector<8x16xf32>
    %cst_12 = arith.constant dense<0.000000e+00> : vector<8xf32>
    %23 = vector.multi_reduction <add>, %22, %cst_12 [1] : vector<8x16xf32> to vector<8xf32>
    %24 = vector.shape_cast %23 : vector<8xf32> to vector<8x1xf32>
    %25 = arith.addf %21, %24 : vector<8x1xf32>
    %c0_13 = arith.constant 0 : index
    %c0_14 = arith.constant 0 : index
    %26 = vector.load %arg6[%c0_13, %c0_14] : memref<8x1xf32, #tpu.memory_space<vmem>>, vector<8x1xf32>
    tpu.vector_store %arg6[%c0_13, %c0_14], %25 {strides = array<i32>} : memref<8x1xf32, #tpu.memory_space<vmem>>, vector<8x1xf32>,
    %c0_i32_15 = arith.constant 0 : i32
    %27 = arith.cmpi eq, %arg1, %c0_i32_15 : i32
    %28 = arith.extui %27 : i1 to i32
    %c0_i32_16 = arith.constant 0 : i32
    %29 = arith.cmpi ne, %28, %c0_i32_16 : i32
    scf.if %29 {
      %c0_17 = arith.constant 0 : index
      %c0_18 = arith.constant 0 : index
      %30 = vector.load %arg5[%c0_17, %c0_18] : memref<8x1xf32, #tpu.memory_space<vmem>>, vector<8x1xf32>
      %cst_19 = arith.constant dense<0.000000e+00> : vector<8xf32>
      %31 = vector.multi_reduction <add>, %30, %cst_19 [1] : vector<8x1xf32> to vector<8xf32>
      %32 = vector.shape_cast %31 : vector<8xf32> to vector<8x1xf32>
      %c0_20 = arith.constant 0 : index
      %c0_21 = arith.constant 0 : index
      %33 = vector.load %arg6[%c0_20, %c0_21] : memref<8x1xf32, #tpu.memory_space<vmem>>, vector<8x1xf32>
      %cst_22 = arith.constant dense<0.000000e+00> : vector<8xf32>
      %34 = vector.multi_reduction <add>, %33, %cst_22 [1] : vector<8x1xf32> to vector<8xf32>
      %35 = vector.shape_cast %34 : vector<8xf32> to vector<8x1xf32>
      %cst_23 = arith.constant 2.700000e+01 : f32
      %36 = vector.broadcast %cst_23 : f32 to vector<8x1xf32>
      %37 = arith.divf %36, %32 : vector<8x1xf32>
      %cst_24 = arith.constant 1.000000e+00 : f32
      %38 = vector.broadcast %cst_24 : f32 to vector<8x1xf32>
      %39 = arith.addf %38, %37 : vector<8x1xf32>
      %40 = math.log %39 : vector<8x1xf32>
      %cst_25 = arith.constant 1.000000e+00 : f32
      %41 = vector.broadcast %cst_25 : f32 to vector<8x1xf32>
      %42 = arith.addf %41, %35 : vector<8x1xf32>
      %43 = math.log %42 : vector<8x1xf32>
      %44 = arith.addf %40, %43 : vector<8x1xf32>
      %c0_26 = arith.constant 0 : index
      %c0_27 = arith.constant 0 : index
      %45 = vector.load %arg4[%c0_26, %c0_27] : memref<8x1xf32, #tpu.memory_space<vmem>>, vector<8x1xf32>
      tpu.vector_store %arg4[%c0_26, %c0_27], %44 {strides = array<i32>} : memref<8x1xf32, #tpu.memory_space<vmem>>, vector<8x1xf32>,
    } else {
    }
    return
  }
  func.func @transform_0(%arg0: i32, %arg1: i32) -> (i32, i32) {
    %c0_i32 = arith.constant 0 : i32
    %c0_i32_0 = arith.constant 0 : i32
    return %arg0, %c0_i32 : i32, i32
  }
  func.func @transform_1(%arg0: i32, %arg1: i32) -> (i32, i32) {
    %c0_i32 = arith.constant 0 : i32
    return %arg0, %arg1 : i32, i32
  }
  func.func @transform_2(%arg0: i32, %arg1: i32) -> (i32, i32) {
    %c0_i32 = arith.constant 0 : i32
    %c0_i32_0 = arith.constant 0 : i32
    return %arg0, %c0_i32 : i32, i32
  }
}

</mosaic_0001>

<llo_original>
// kernel: tpu_custom_call.1
$region0: #{tpu_custom_call.1}
  #allocation0 [shape = 'u32[]', space=smem, size = 0x4, offset = 0x4, fixed_abs, tag = 'smem constant byte address 0x4 - core index']
  #allocation1 [shape = 'u32[72,128]{1,0:T(1,128)}', space=vmem, size = 0x9000, scoped, tag = 'internal scratch']
  #allocation2 [shape = 'f32[8,1]{1,0:T(8,128)}', space=vmem, size = 0x1000, scoped, tag = 'scratch operand']
  #allocation3 [shape = 'f32[8,1]{1,0:T(8,128)}', space=vmem, size = 0x1000, scoped, tag = 'scratch operand']
  %s0 = inlined_call_operand.vmem [shape: s32[8,1], index: 0, kind: input, shape index: {}]
  %s1 = inlined_call_operand.vmem [shape: f32[8,16], index: 1, kind: input, shape index: {}]
  %s2 = inlined_call_operand.vmem [shape: f32[8,1], index: 2, kind: output, shape index: {}]
  %s3 = sld [smem:[#allocation0]]
  $region26: #{tpu_custom_call.1} parent=0
    _
  %s5 = ssub.s32 1, %s3
  %s6 = scalar_select 0, %s5, %s3
  // Predicated region
  $region2: #{tpu_custom_call.1} parent=0 // pred_check
    _
  $region3: #{tpu_custom_call.1} parent=0 // pred_check_branch
    %8 = sbr.rel (0) target = $region5
  $region4: #{tpu_custom_call.1} parent=0 // pred_region
    _
  $region5: #{tpu_custom_call.1} parent=0 // pred_fallthru
    _
  // Predicated region
  $region6: #{tpu_custom_call.1} parent=0 // pred_check
    _
  $region7: #{tpu_custom_call.1} parent=0 // pred_check_branch
    %10 = sbr.rel (0) target = $region9
  $region8: #{tpu_custom_call.1} parent=0 // pred_region
    _
  $region9: #{tpu_custom_call.1} parent=0 // pred_fallthru
    _
  %p11 = scmp.eq.s32.totalorder 0, 0
  // Predicated region
  $region10: #{tpu_custom_call.1} parent=0 // pred_check
    %p12 = pneg %p11
  $region11: #{tpu_custom_call.1} parent=0 // pred_check_branch
    %14 = sbr.rel (%p12) target = $region13
  $region12: #{tpu_custom_call.1} parent=0 // pred_region
    %vm15 = vcmask 7168
    %16 = vst.msk [vmem:[#allocation2] sm:$0xff] %vm15, 0.0
    %17 = vst.msk [vmem:[#allocation3] sm:$0xff] %vm15, 0.0
  $region13: #{tpu_custom_call.1} parent=0 // pred_fallthru
    _
  %v18 = vld [vmem:[%s1] sm:$0xff]
  %v19 = vmul.f32 %v18, 30.0
  %v20 = vmul.f32 %v19, 1.442695
  %v21 = vpow.pop %v20
  %v22 = vlaneseq
  %v23 = vand.u32 %v22, 127
  %v24 = vld [vmem:[%s0] sm:$0xff]
  %s25 = smul.u32 0, 16
  %v26 = vstv %s25
  %v27 = vsub.s32 %v24, %v26
  %28 = vset.pattern.permute.xlu0 0
  %29 = vperm.xlu0 %28, %v27
  %v30 = vpop.permute.xlu0 %29
  %vm31 = vcmp.eq.s32.totalorder %v23, %v30
  %v32 = vsel %vm31, %v21, 0.0
  %v33 = vld [vmem:[#allocation2] sm:$0xff]
  %vm34 = vcmask 130048
  %v35 = vsel %vm34, %v32, 0.0
  %36 = vadd.xlane.f32.xlu0 %v35
  %v37 = vpop.xlane.xlu0 %36
  %v38 = vadd.f32 %v33, %v37
  %vm39 = vcmask 7168
  %40 = vst.msk [vmem:[#allocation2] sm:$0xff] %vm39, %v38
  %v41 = vld [vmem:[#allocation3] sm:$0xff]
  %v42 = vsub.f32 %v21, %v32
  %v43 = vsel %vm34, %v42, 0.0
  %44 = vadd.xlane.f32.xlu0 %v43
  %v45 = vpop.xlane.xlu0 %44
  %v46 = vadd.f32 %v41, %v45
  %47 = vst.msk [vmem:[#allocation3] sm:$0xff] %vm39, %v46
  // Predicated region
  $region14: #{tpu_custom_call.1} parent=0 // pred_check
    %p48 = pneg %p11
  $region15: #{tpu_custom_call.1} parent=0 // pred_check_branch
    %50 = sbr.rel (%p48) target = $region17
  $region16: #{tpu_custom_call.1} parent=0 // pred_region
    %v51 = vld [vmem:[#allocation2] sm:$0xff]
    %v52 = vadd.f32 %v51, 0.0
    %v53 = vld [vmem:[#allocation3] sm:$0xff]
    %v54 = vadd.f32 %v53, 0.0
    %v55 = vrcp.pop %v52
    %v56 = vmul.f32 %v52, %v55
    %v57 = vsub.f32 1.0, %v56
    %v58 = vmul.f32 %v55, %v57
    %v59 = vadd.f32 %v55, %v58
    %vm60 = vweird.f32 %v52
    %vm61 = vweird.f32 %v55
    %vm62 = vmor %vm60, %vm61
    %v63 = vsel %vm62, %v55, %v59
    %v64 = vand.u32 2147483647, %v52
    %vm65 = vcmp.eq.f32.partialorder %v64, 8.507059e+37
    %v66 = vand.u32 %v52, 2147483648
    %v67 = vor.u32 1.1754944e-38, %v66
    %v68 = vsel %vm65, %v67, %v63
    %v69 = vmul.f32 27.0, %v68
    %v70 = vadd.f32 %v69, 1.0
    %v71 = vlog2.pop %v70
    %v72 = vmul.f32 %v71, 0.6931472
    %v73 = vadd.f32 %v54, 1.0
    %v74 = vlog2.pop %v73
    %v75 = vmul.f32 %v74, 0.6931472
    %v76 = vadd.f32 %v72, %v75
    %77 = vst.msk [vmem:[%s2] sm:$0xff] %vm39, %v76
  $region17: #{tpu_custom_call.1} parent=0 // pred_fallthru
    _
  // Predicated region
  $region18: #{tpu_custom_call.1} parent=0 // pred_check
    _
  $region19: #{tpu_custom_call.1} parent=0 // pred_check_branch
    %79 = sbr.rel (0) target = $region21
  $region20: #{tpu_custom_call.1} parent=0 // pred_region
    _
  $region21: #{tpu_custom_call.1} parent=0 // pred_fallthru
    _
  // Predicated region
  $region22: #{tpu_custom_call.1} parent=0 // pred_check
    _
  $region23: #{tpu_custom_call.1} parent=0 // pred_check_branch
    %81 = sbr.rel (0) target = $region25
  $region24: #{tpu_custom_call.1} parent=0 // pred_region
    _
  $region25: #{tpu_custom_call.1} parent=0 // pred_fallthru
    _

</llo_original>
